<compile_context>
chip_gen: v5e
topology: v5e:2x2
jax: 0.10.0
libtpu: 0.0.40
codegen_flags: <defaults>
</compile_context>

<pallas_src>
import jax
import jax.numpy as jnp
from jax.experimental import pallas as pl
from jax.experimental.pallas import tpu as pltpu


def build_grid(resolution, vmin=-1.0, vmax=1.0):
    """4-channel positional grid: coords running [vmin..vmax] / [vmax..vmin]."""
    # TODO(synk): build_grid is reconstructed from the module docstring
    # (channel order [y, x, -y, -x]); the original implementation was not given.
    H, W = resolution
    ys = jnp.linspace(vmin, vmax, H, dtype=jnp.float32)
    xs = jnp.linspace(vmin, vmax, W, dtype=jnp.float32)
    gy, gx = jnp.meshgrid(ys, xs, indexing="ij")
    g = jnp.stack([gy, gx], axis=-1)              # (H, W, 2)
    g = jnp.concatenate([g, -g], axis=-1)         # (H, W, 4)
    return g[None]                                # (1, H, W, 4)


# ------------------------------- kernel --------------------------------------

def _add_bcast_kernel(x_ref, emb_ref, o_ref):
    """x tile + emb tile; emb broadcast over x's extra leading dim(s).

    Shapes: 3-D path  x (tb, rc, L) + emb (rc, L)
            flat path x (tb, N)     + emb (1, N)
    The broadcast is free VPU slack in this HBM-bandwidth-bound add."""
    o_ref[...] = (x_ref[...] + emb_ref[...]).astype(o_ref.dtype)


# --------------------------- tiling heuristics --------------------------------

def _divisors(n):
    return [d for d in range(1, n + 1) if n % d == 0]


def _pick_tb(batch, item_bytes, target_bytes, min_split_bytes):
    """Items per grid step for whole-item batch tiling (3-D layout; no sublane
    constraint on the leading dim)."""
    in_budget = [d for d in _divisors(batch) if d * item_bytes <= target_bytes]
    if not in_budget:
        return 1
    # Keep >= 2 grid steps (v7x megacore sharding / DMA overlap) only when each
    # step's block is still >= min_split_bytes; otherwise one big block wins.
    split_ok = [d for d in in_budget
                if batch // d >= 2 and d * item_bytes >= min_split_bytes]
    return max(split_ok) if split_ok else max(in_budget)


def _pick_rc(rows, row_bytes, target_bytes):
    """Row chunk (multiple of 8) for intra-item tiling when one item exceeds
    the block budget."""
    cands = [d for d in range(8, rows + 1, 8) if rows % d == 0]
    if not cands:
        return rows   # no multiple-of-8 divisor of R; fall back to a full item
    in_budget = [d for d in cands if d * row_bytes <= target_bytes]
    return max(in_budget) if in_budget else min(cands)


def _pick_tb_flat(batch, item_bytes, target_bytes):
    """Items per grid step for the flattened (lane = R*L) layout; the item count
    is the sublane dim so it must be a multiple of 8 (or the full batch)."""
    cands = sorted(set([d for d in range(8, batch + 1, 8) if batch % d == 0]
                       + [batch]))
    in_budget = [d for d in cands if d * item_bytes <= target_bytes]
    return max(in_budget) if in_budget else min(cands)


# ------------------------------- wrapper --------------------------------------

def soft_position_embed_forward(inputs, conv_weight, conv_bias, grid,
                                *, channels_last=True,
                                target_block_bytes=4 << 20,
                                min_split_bytes=1 << 20):
    """Equivalent of SoftPositionEmbed.forward(inputs, channels_last).

    inputs      : (B, H, W, C) if channels_last else (B, C, H, W)
    conv_weight : (C, 4) or (C, 4, 1, 1)  -- Conv2d(4, C, kernel_size=1) weight
    conv_bias   : (C,)
    grid        : (1, H, W, 4) or (H, W, 4) positional grid (channels-last)
    """
    grid = jnp.asarray(grid, jnp.float32)
    if grid.ndim == 4:
        grid = grid[0]                                    # (H, W, 4)
    H, W, K = grid.shape
    C = int(conv_weight.shape[0])
    B = int(inputs.shape[0])
    dtype = inputs.dtype
    itemsize = dtype.itemsize

    # ---- 1) tiny one-shot projection: plain XLA einsum (K=4 would waste the
    #         MXU; a separate pallas_call costs more than the whole add). ----
    w = jnp.asarray(conv_weight, jnp.float32).reshape(C, K)
    b = jnp.asarray(conv_bias, jnp.float32)
    emb = jnp.einsum("hwk,ck->hwc", grid, w) + b          # (H, W, C) f32

    # ---- 2) lane-dense layouts for the memory-bound broadcast-add ----
    if channels_last:                                     # inputs (B, H, W, C)
        R, L = H, W * C
        x3d = inputs.reshape(B, R, L)
        emb2d = emb.reshape(R, L)
    else:                                                 # inputs (B, C, H, W)
        R, L = C, H * W
        x3d = inputs.reshape(B, R, L)
        emb2d = emb.transpose(2, 0, 1).reshape(R, L)
    emb2d = emb2d.astype(dtype)
    item_bytes = R * L * itemsize

    # VMEM budget note: worst case is x + out double-buffered at block size plus
    # emb double-buffered at <= block size -> ~6 x 4 MiB = 24 MiB, safe under the
    # 32 MiB scoped default on v6e/v7x; 48 MiB limit gives fallback paths
    # headroom and stays below v7x's 64 MiB physical VMEM (v5e default is 16 MiB
    # so it must be raised explicitly).
    cparams = lambda ndims: pltpu.CompilerParams(
        dimension_semantics=("parallel",) * ndims,
        vmem_limit_bytes=48 << 20)

    # Fallback: natural lane dim not 128-aligned but the whole item is ->
    # flatten so output stores stay unmasked (biggest measured lever).
    if L % 128 != 0 and (R * L) % 128 == 0:
        N = R * L
        x2d = x3d.reshape(B, N)
        emb_row = emb2d.reshape(1, N)
        tb = _pick_tb_flat(B, item_bytes, target_block_bytes)
        out = pl.pallas_call(
            _add_bcast_kernel,
            out_shape=jax.ShapeDtypeStruct((B, N), dtype),
            grid=(B // tb,),
            in_specs=[pl.BlockSpec((tb, N), lambda i: (i, 0)),
                      pl.BlockSpec((1, N), lambda i: (0, 0))],
            out_specs=pl.BlockSpec((tb, N), lambda i: (i, 0)),
            compiler_params=cparams(1),
        )(x2d, emb_row)
        return out.reshape(inputs.shape)

    # Primary 3-D path: block = (tb items) x (rc rows) x (full lane).
    if item_bytes <= target_block_bytes:
        tb = _pick_tb(B, item_bytes, target_block_bytes, min_split_bytes)
        rc = R                                            # whole items per block
    else:
        tb = 1                                            # intra-item row tiling
        rc = _pick_rc(R, L * itemsize, target_block_bytes)

    out = pl.pallas_call(
        _add_bcast_kernel,
        out_shape=jax.ShapeDtypeStruct((B, R, L), dtype),
        grid=(B // tb, R // rc),
        in_specs=[pl.BlockSpec((tb, rc, L), lambda i, j: (i, j, 0)),
                  pl.BlockSpec((rc, L), lambda i, j: (j, 0))],
        out_specs=pl.BlockSpec((tb, rc, L), lambda i, j: (i, j, 0)),
        compiler_params=cparams(2),
    )(x3d, emb2d)
    return out.reshape(inputs.shape)


if __name__ == "__main__":
    # Small shapes consistent with the module: batch=2, hidden=32, resolution 16x16.
    B, C, H, W = 2, 32, 16, 16
    key = jax.random.PRNGKey(0)
    kx, kw, kb = jax.random.split(key, 3)
    x_nhwc = jax.random.normal(kx, (B, H, W, C), dtype=jnp.float32)
    conv_w = jax.random.normal(kw, (C, 4), dtype=jnp.float32) * 0.1   # Conv2d(4,C,1) weight
    conv_b = jax.random.normal(kb, (C,), dtype=jnp.float32) * 0.1     # Conv2d bias
    pos_grid = build_grid((H, W))                                     # (1, H, W, 4)

    # Pure-JAX reference for the projected embedding.
    emb_ref = jnp.einsum("hwk,ck->hwc", pos_grid[0], conv_w) + conv_b  # (H, W, C)

    # channels_last=True
    y = soft_position_embed_forward(x_nhwc, conv_w, conv_b, pos_grid,
                                    channels_last=True)
    y = jax.block_until_ready(y)
    ref = x_nhwc + emb_ref[None]
    assert y.shape == x_nhwc.shape and y.dtype == x_nhwc.dtype
    assert jnp.allclose(y, ref, atol=1e-5, rtol=1e-5), "mismatch (channels_last=True)"

    # channels_last=False
    x_nchw = jnp.transpose(x_nhwc, (0, 3, 1, 2))
    y2 = soft_position_embed_forward(x_nchw, conv_w, conv_b, pos_grid,
                                     channels_last=False)
    y2 = jax.block_until_ready(y2)
    ref2 = x_nchw + jnp.transpose(emb_ref, (2, 0, 1))[None]
    assert y2.shape == x_nchw.shape and y2.dtype == x_nchw.dtype
    assert jnp.allclose(y2, ref2, atol=1e-5, rtol=1e-5), "mismatch (channels_last=False)"

    print("KERNEL_OK")
</pallas_src>

<mosaic_0001>
module attributes {stable_mosaic.version = 11 : i64} {
  func.func @_add_bcast_kernel(%arg0: i32, %arg1: i32, %arg2: memref<2x16x512xf32, #tpu.memory_space<vmem>>, %arg3: memref<16x512xf32, #tpu.memory_space<vmem>>, %arg4: memref<2x16x512xf32, #tpu.memory_space<vmem>>) attributes {dimension_semantics = [#tpu.dimension_semantics<parallel>, #tpu.dimension_semantics<parallel>], iteration_bounds = array<i64: 1, 1>, scalar_prefetch = 0 : i64, scratch_operands = 0 : i64, tpu.core_type = #tpu.core_type<tc>, window_params = [{transform_indices = @transform_0, window_bounds = array<i64: 2, 16, 512>}, {transform_indices = @transform_1, window_bounds = array<i64: 16, 512>}, {transform_indices = @transform_2, window_bounds = array<i64: 2, 16, 512>}]} {
    %c0 = arith.constant 0 : index
    %c0_0 = arith.constant 0 : index
    %c0_1 = arith.constant 0 : index
    %0 = vector.load %arg2[%c0, %c0_0, %c0_1] : memref<2x16x512xf32, #tpu.memory_space<vmem>>, vector<2x16x512xf32>
    %c0_2 = arith.constant 0 : index
    %c0_3 = arith.constant 0 : index
    %1 = vector.load %arg3[%c0_2, %c0_3] : memref<16x512xf32, #tpu.memory_space<vmem>>, vector<16x512xf32>
    %2 = vector.shape_cast %1 : vector<16x512xf32> to vector<1x16x512xf32>
    %3 = vector.broadcast %2 : vector<1x16x512xf32> to vector<2x16x512xf32>
    %4 = arith.addf %0, %3 : vector<2x16x512xf32>
    %c0_4 = arith.constant 0 : index
    %c0_5 = arith.constant 0 : index
    %c0_6 = arith.constant 0 : index
    %5 = vector.load %arg4[%c0_4, %c0_5, %c0_6] : memref<2x16x512xf32, #tpu.memory_space<vmem>>, vector<2x16x512xf32>
    tpu.vector_store %arg4[%c0_4, %c0_5, %c0_6], %4 {strides = array<i32>} : memref<2x16x512xf32, #tpu.memory_space<vmem>>, vector<2x16x512xf32>,
    return
  }
  func.func @transform_0(%arg0: i32, %arg1: i32) -> (i32, i32, i32) {
    %c0_i32 = arith.constant 0 : i32
    %c0_i32_0 = arith.constant 0 : i32
    return %arg0, %arg1, %c0_i32 : i32, i32, i32
  }
  func.func @transform_1(%arg0: i32, %arg1: i32) -> (i32, i32) {
    %c0_i32 = arith.constant 0 : i32
    %c0_i32_0 = arith.constant 0 : i32
    return %arg1, %c0_i32 : i32, i32
  }
  func.func @transform_2(%arg0: i32, %arg1: i32) -> (i32, i32, i32) {
    %c0_i32 = arith.constant 0 : i32
    %c0_i32_0 = arith.constant 0 : i32
    return %arg0, %arg1, %c0_i32 : i32, i32, i32
  }
}

</mosaic_0001>

<llo_original>
// kernel: tpu_custom_call.1
$region0: #{tpu_custom_call.1}
  #allocation0 [shape = 'u32[]', space=smem, size = 0x4, offset = 0x4, fixed_abs, tag = 'smem constant byte address 0x4 - core index']
  #allocation1 [shape = 'u32[72,128]{1,0:T(1,128)}', space=vmem, size = 0x9000, scoped, tag = 'internal scratch']
  %s0 = inlined_call_operand.hbm [shape: f32[2,16,512], index: 0, kind: input, shape index: {}]
  %s1 = inlined_call_operand.hbm [shape: f32[16,512], index: 1, kind: input, shape index: {}]
  %s2 = inlined_call_operand.hbm [shape: f32[2,16,512], index: 2, kind: output, shape index: {}]
  %s3 = sld [smem:[#allocation0]]
  $region26: #{tpu_custom_call.1} parent=0
    _
  %s5 = ssub.s32 1, %s3
  %s6 = scalar_select 0, %s5, %s3
  $region1: #{tpu_custom_call.1} parent=0
    #allocation2 [shape = 'u8[65536]{0}', space=vmem, size = 0x10000, scoped, tag = 'input window, operand 0, single buffered']
    #allocation3 [shape = 's32[1]{0}', space=sflag, size = 0x4, scoped, tag = 'scoped memory for tpu_custom_call.1']
    #allocation4 [shape = 's32[1]{0}', space=sflag, size = 0x4, scoped, tag = 'scoped memory for tpu_custom_call.1']
    #allocation5 [shape = 'u8[32768]{0}', space=vmem, size = 0x8000, scoped, tag = 'input window, operand 1, single buffered']
    #allocation6 [shape = 's32[1]{0}', space=sflag, size = 0x4, scoped, tag = 'scoped memory for tpu_custom_call.1']
    #allocation7 [shape = 'u8[65536]{0}', space=vmem, size = 0x10000, scoped, tag = 'output window, operand 0, single buffered']
    %7 = vsyncpa [#allocation3], 0
    %8 = vsyncpa [#allocation6], 0
    %9 = vsyncpa [#allocation4], 0
    // Predicated region
    $region2: #{tpu_custom_call.1} parent=1 // pred_check
      _
    $region3: #{tpu_custom_call.1} parent=1 // pred_check_branch
      %11 = sbr.rel (0) target = $region5
    $region4: #{tpu_custom_call.1} parent=1 // pred_region
      %13 = vsyncadd [#allocation3], 0
      %s14 = sshll.u32 %s0, 4
      %s15 = int_to_ptr.hbm [resolvable:$true] %s14
      %s16 = sshll.u32 [#allocation2], 4
      %s17 = int_to_ptr.vmem [resolvable:$true] %s16
      %22 = dma.hbm_to_vmem [thread:$0]  %s15, 2048, %s17, [#allocation3], 512, 512, 32
    $region5: #{tpu_custom_call.1} parent=1 // pred_fallthru
      _
    // Predicated region
    $region6: #{tpu_custom_call.1} parent=1 // pred_check
      _
    $region7: #{tpu_custom_call.1} parent=1 // pred_check_branch
      %24 = sbr.rel (0) target = $region9
    $region8: #{tpu_custom_call.1} parent=1 // pred_region
      %26 = vsyncadd [#allocation6], 0
      %s27 = sshll.u32 %s1, 4
      %s28 = int_to_ptr.hbm [resolvable:$true] %s27
      %s29 = sshll.u32 [#allocation5], 4
      %s30 = int_to_ptr.vmem [resolvable:$true] %s29
      %35 = dma.hbm_to_vmem [thread:$0]  %s28, 1024, %s30, [#allocation6], 512, 512, 32
    $region9: #{tpu_custom_call.1} parent=1 // pred_fallthru
      _
    // Predicated region
    $region10: #{tpu_custom_call.1} parent=1 // pred_check
      _
    $region11: #{tpu_custom_call.1} parent=1 // pred_check_branch
      %37 = sbr.rel (0) target = $region13
    $region12: #{tpu_custom_call.1} parent=1 // pred_region
      %39 = dma.done [#allocation3], 2048
    $region13: #{tpu_custom_call.1} parent=1 // pred_fallthru
      _
    // Predicated region
    $region14: #{tpu_custom_call.1} parent=1 // pred_check
      _
    $region15: #{tpu_custom_call.1} parent=1 // pred_check_branch
      %41 = sbr.rel (0) target = $region17
    $region16: #{tpu_custom_call.1} parent=1 // pred_region
      %43 = dma.done [#allocation6], 1024
    $region17: #{tpu_custom_call.1} parent=1 // pred_fallthru
      _
    %v44 = vld [vmem:[#allocation2] sm:$0xff]
    %v45 = vld [vmem:[#allocation2 + $0x8] sm:$0xff]
    %v46 = vld [vmem:[#allocation2 + $0x10] sm:$0xff]
    %v47 = vld [vmem:[#allocation2 + $0x18] sm:$0xff]
    %v48 = vld [vmem:[#allocation2 + $0x20] sm:$0xff]
    %v49 = vld [vmem:[#allocation2 + $0x28] sm:$0xff]
    %v50 = vld [vmem:[#allocation2 + $0x30] sm:$0xff]
    %v51 = vld [vmem:[#allocation2 + $0x38] sm:$0xff]
    %v52 = vld [vmem:[#allocation2 + $0x40] sm:$0xff]
    %v53 = vld [vmem:[#allocation2 + $0x48] sm:$0xff]
    %v54 = vld [vmem:[#allocation2 + $0x50] sm:$0xff]
    %v55 = vld [vmem:[#allocation2 + $0x58] sm:$0xff]
    %v56 = vld [vmem:[#allocation2 + $0x60] sm:$0xff]
    %v57 = vld [vmem:[#allocation2 + $0x68] sm:$0xff]
    %v58 = vld [vmem:[#allocation2 + $0x70] sm:$0xff]
    %v59 = vld [vmem:[#allocation2 + $0x78] sm:$0xff]
    %v60 = vld [vmem:[#allocation5] sm:$0xff]
    %v61 = vld [vmem:[#allocation5 + $0x8] sm:$0xff]
    %v62 = vld [vmem:[#allocation5 + $0x10] sm:$0xff]
    %v63 = vld [vmem:[#allocation5 + $0x18] sm:$0xff]
    %v64 = vld [vmem:[#allocation5 + $0x20] sm:$0xff]
    %v65 = vld [vmem:[#allocation5 + $0x28] sm:$0xff]
    %v66 = vld [vmem:[#allocation5 + $0x30] sm:$0xff]
    %v67 = vld [vmem:[#allocation5 + $0x38] sm:$0xff]
    %v68 = vadd.f32 %v44, %v60
    %v69 = vadd.f32 %v45, %v61
    %v70 = vadd.f32 %v46, %v62
    %v71 = vadd.f32 %v47, %v63
    %v72 = vadd.f32 %v48, %v64
    %v73 = vadd.f32 %v49, %v65
    %v74 = vadd.f32 %v50, %v66
    %v75 = vadd.f32 %v51, %v67
    %v76 = vadd.f32 %v52, %v60
    %v77 = vadd.f32 %v53, %v61
    %v78 = vadd.f32 %v54, %v62
    %v79 = vadd.f32 %v55, %v63
    %v80 = vadd.f32 %v56, %v64
    %v81 = vadd.f32 %v57, %v65
    %v82 = vadd.f32 %v58, %v66
    %v83 = vadd.f32 %v59, %v67
    %84 = vst [vmem:[#allocation7] sm:$0xff] %v68
    %85 = vst [vmem:[#allocation7 + $0x8] sm:$0xff] %v69
    %86 = vst [vmem:[#allocation7 + $0x10] sm:$0xff] %v70
    %87 = vst [vmem:[#allocation7 + $0x18] sm:$0xff] %v71
    %88 = vst [vmem:[#allocation7 + $0x20] sm:$0xff] %v72
    %89 = vst [vmem:[#allocation7 + $0x28] sm:$0xff] %v73
    %90 = vst [vmem:[#allocation7 + $0x30] sm:$0xff] %v74
    %91 = vst [vmem:[#allocation7 + $0x38] sm:$0xff] %v75
    %92 = vst [vmem:[#allocation7 + $0x40] sm:$0xff] %v76
    %93 = vst [vmem:[#allocation7 + $0x48] sm:$0xff] %v77
    %94 = vst [vmem:[#allocation7 + $0x50] sm:$0xff] %v78
    %95 = vst [vmem:[#allocation7 + $0x58] sm:$0xff] %v79
    %96 = vst [vmem:[#allocation7 + $0x60] sm:$0xff] %v80
    %97 = vst [vmem:[#allocation7 + $0x68] sm:$0xff] %v81
    %98 = vst [vmem:[#allocation7 + $0x70] sm:$0xff] %v82
    %99 = vst [vmem:[#allocation7 + $0x78] sm:$0xff] %v83
    // Predicated region
    $region18: #{tpu_custom_call.1} parent=1 // pred_check
      _
    $region19: #{tpu_custom_call.1} parent=1 // pred_check_branch
      %101 = sbr.rel (0) target = $region21
    $region20: #{tpu_custom_call.1} parent=1 // pred_region
      %103 = vsyncadd [#allocation4], 0
      %s104 = sshll.u32 [#allocation7], 4
      %s105 = int_to_ptr.vmem [resolvable:$true] %s104
      %s106 = sshll.u32 %s2, 4
      %s107 = int_to_ptr.hbm [resolvable:$true] %s106
      %112 = dma.vmem_to_hbm [thread:$0]  %s105, 2048, %s107, [#allocation4], 512, 512, 32
    $region21: #{tpu_custom_call.1} parent=1 // pred_fallthru
      _
    // Predicated region
    $region22: #{tpu_custom_call.1} parent=1 // pred_check
      _
    $region23: #{tpu_custom_call.1} parent=1 // pred_check_branch
      %114 = sbr.rel (0) target = $region25
    $region24: #{tpu_custom_call.1} parent=1 // pred_region
      %116 = dma.done [#allocation4], 2048
    $region25: #{tpu_custom_call.1} parent=1 // pred_fallthru
      _
    %117 = vsyncpa [#allocation3], 1
    %118 = vsyncpa [#allocation6], 1
    %119 = vsyncpa [#allocation4], 1

</llo_original>
